<compile_context>
chip_gen: v7x
topology: tpu7x:2x2x1
jax: 0.10.0
libtpu: 0.0.40
codegen_flags: <defaults>
</compile_context>

<pallas_src>
import jax
import jax.numpy as jnp
from jax import lax
from jax.experimental import pallas as pl
from jax.experimental.pallas import tpu as pltpu


_LANE = 128
_UNROLL_CHUNK_LIMIT = 32   # fully unroll the lane-chunk loop up to this many chunks
_CHUNK_GROUP = 8           # fori_loop body processes this many chunks per iteration


def _round_up(x: int, m: int) -> int:
    return ((x + m - 1) // m) * m


def _sublane_quantum(dtype) -> int:
    # Minimum sublane tile: 8 for 32-bit, 16 for 16-bit, 32 for 8-bit dtypes.
    return {4: 8, 2: 16, 1: 32}.get(jnp.dtype(dtype).itemsize, 8)


def _make_iou_kernel(hw: int, hw_tile: int, n_hw: int, needs_mask: bool):
    n_chunks = hw_tile // _LANE

    def kernel(pred_ref, gt_ref, out_ref, acc_pg_ref, acc_sum_ref):
        h = pl.program_id(1)

        @pl.when(h == 0)
        def _():
            acc_pg_ref[...] = jnp.zeros_like(acc_pg_ref)
            acc_sum_ref[...] = jnp.zeros_like(acc_sum_ref)

        def accumulate_chunk(start, statically_full):
            # start: 128-aligned lane offset (static int or traced int32).
            p = pred_ref[:, pl.ds(start, _LANE)].astype(jnp.float32)
            g = gt_ref[:, pl.ds(start, _LANE)].astype(jnp.float32)
            if needs_mask and not statically_full:
                lane = lax.broadcasted_iota(jnp.int32, p.shape, 1)
                valid = (h * hw_tile + start + lane) < hw
                p = jnp.where(valid, p, 0.0)
                g = jnp.where(valid, g, 0.0)
            # Lane-dense accumulation: pure VALU adds into (row_tile, 128)
            # accumulators; the cross-lane reduce is deferred to the epilogue.
            acc_pg_ref[...] += p * g
            acc_sum_ref[...] += p + g

        if n_chunks <= _UNROLL_CHUNK_LIMIT:
            for c in range(n_chunks):
                full = (n_hw == 1) and ((c + 1) * _LANE <= hw)
                accumulate_chunk(c * _LANE, full)
        else:
            n_groups = n_chunks // _CHUNK_GROUP

            def group_body(gi, carry):
                base = pl.multiple_of(gi * (_CHUNK_GROUP * _LANE), _LANE)
                for j in range(_CHUNK_GROUP):
                    accumulate_chunk(base + j * _LANE, False)
                return carry

            lax.fori_loop(0, n_groups, group_body, 0)
            for c in range(n_groups * _CHUNK_GROUP, n_chunks):
                full = (n_hw == 1) and ((c + 1) * _LANE <= hw)
                accumulate_chunk(c * _LANE, full)

        @pl.when(h == pl.num_programs(1) - 1)
        def _():
            inter = jnp.sum(acc_pg_ref[...], axis=-1, keepdims=True)
            union = jnp.sum(acc_sum_ref[...], axis=-1, keepdims=True) - inter + 1e-6
            out_ref[...] = inter / union

    return kernel


def iou(
    pred: jax.Array,
    gt: jax.Array,
    reduce: bool = False,
    *,
    row_tile_max: int = 256,
    target_block_bytes: int = 6 * 1024 * 1024,
) -> jax.Array:
    """Pallas implementation of the IoU module's forward pass.

    pred, gt: (B, C, *spatial) arrays (NCHW-style, like the PyTorch module).
    Returns (B, C) if reduce=False, else a scalar.
    """
    assert pred.shape == gt.shape, "pred and gt must have the same shape"
    assert pred.ndim >= 2, "expected (B, C, *spatial) inputs"
    B, C = pred.shape[0], pred.shape[1]
    hw = 1
    for d in pred.shape[2:]:
        hw *= d
    R = B * C

    # Flatten: rows = (B, C) pairs on the sublane axis, spatial on the lane axis.
    pred_f = pred.reshape(R, hw)
    gt_f = gt.reshape(R, hw)

    p_isz = jnp.dtype(pred.dtype).itemsize
    g_isz = jnp.dtype(gt.dtype).itemsize
    itemsize = max(p_isz, g_isz)
    q = max(_sublane_quantum(pred.dtype), _sublane_quantum(gt.dtype))

    # Clamp the per-input block budget: 2 inputs x 2 pipeline buffers must stay
    # comfortably under the 48 MiB scoped limit (v7x physical VMEM is 64 MiB).
    target_block_bytes = max(4 * 1024, min(int(target_block_bytes), 10 * 1024 * 1024))

    hw_pad = _round_up(hw, _LANE)
    r_pad = _round_up(R, q)

    # Contiguity-biased tiling: prefer a full spatial row per block (one
    # contiguous HBM run per row -> fewest DMA descriptors), shrinking row_tile
    # to honour the block-byte budget; only tile the lane axis when even a
    # q-row slab of the full row exceeds the budget.
    if q * hw_pad * itemsize <= target_block_bytes:
        hw_tile = hw_pad
        rows_fit = max(q, (target_block_bytes // (hw_pad * itemsize)) // q * q)
    else:
        hw_tile = min(
            hw_pad,
            max(4 * _LANE, (target_block_bytes // (q * itemsize)) // _LANE * _LANE),
        )
        rows_fit = q

    row_tile = max(q, min(rows_fit, _round_up(min(row_tile_max, r_pad), q)))
    row_tile = min(row_tile, r_pad)
    # Megacore (v7x: 2 TensorCores sharded over the "parallel" axis): keep >=2
    # row tiles whenever the row count allows it so both cores stream HBM.
    if R > q:
        row_tile = min(row_tile, _round_up(pl.cdiv(R, 2), q))
    # TODO(synk): when R <= q (tiny B*C with huge HW) add a size-2 parallel
    # split of the HW axis (two partial accumulator columns combined in the
    # wrapper) so v7x's second TensorCore is not idle.

    grid = (pl.cdiv(R, row_tile), pl.cdiv(hw, hw_tile))
    needs_mask = (hw % hw_tile) != 0

    block_bytes = row_tile * hw_tile * itemsize
    vmem_limit = min(48 * 1024 * 1024, max(32 * 1024 * 1024, 4 * block_bytes + (4 << 20)))

    cost = pl.CostEstimate(
        flops=3 * R * hw + 2 * R,
        transcendentals=0,
        bytes_accessed=R * hw * (p_isz + g_isz) + R * 4,
    )

    out = pl.pallas_call(
        _make_iou_kernel(hw, hw_tile, grid[1], needs_mask),
        # Keep the per-(B,C) map in f32 (tiny) so the reduce=True mean stays exact.
        out_shape=jax.ShapeDtypeStruct((R, 1), jnp.float32),
        grid_spec=pltpu.PrefetchScalarGridSpec(
            num_scalar_prefetch=0,
            grid=grid,
            in_specs=[
                pl.BlockSpec((row_tile, hw_tile), lambda r, h: (r, h)),
                pl.BlockSpec((row_tile, hw_tile), lambda r, h: (r, h)),
            ],
            # Output block constant along the hw (reduction) axis -> resident
            # target, written back once per row tile.
            out_specs=pl.BlockSpec((row_tile, 1), lambda r, h: (r, 0)),
            scratch_shapes=[
                pltpu.VMEM((row_tile, _LANE), jnp.float32),  # sum(p * g), lane-dense
                pltpu.VMEM((row_tile, _LANE), jnp.float32),  # sum(p + g), lane-dense
            ],
        ),
        compiler_params=pltpu.CompilerParams(
            dimension_semantics=("parallel", "arbitrary"),
            vmem_limit_bytes=int(vmem_limit),
        ),
        cost_estimate=cost,
    )(pred_f, gt_f)

    out = out.reshape(B, C)
    out_dtype = pred.dtype if jnp.issubdtype(pred.dtype, jnp.floating) else jnp.float32

    if reduce:
        # matches: (intersect / union).sum() / intersect.numel(), mean in f32.
        return (jnp.sum(out) / out.size).astype(out_dtype)
    return out.astype(out_dtype)


if __name__ == "__main__":
    def ref_iou(pred, gt, reduce=False):
        dims = tuple(range(2, pred.ndim))
        pg = pred * gt
        inter = pg.sum(axis=dims)
        union = (pred + gt - pg).sum(axis=dims) + 1e-6
        out = inter / union
        return out.sum() / out.size if reduce else out

    key = jax.random.PRNGKey(0)
    k1, k2 = jax.random.split(key)
    B, C, H, W = 2, 4, 16, 16
    # Soft masks in [0, 1], like sigmoid outputs / binary ground truth.
    pred = jax.random.uniform(k1, (B, C, H, W), dtype=jnp.float32)
    gt = (jax.random.uniform(k2, (B, C, H, W), dtype=jnp.float32) > 0.5).astype(jnp.float32)

    out = jax.block_until_ready(iou(pred, gt, reduce=False))
    assert out.shape == (B, C)
    assert jnp.allclose(out, ref_iou(pred, gt), atol=1e-5, rtol=1e-5)

    out_r = jax.block_until_ready(iou(pred, gt, reduce=True))
    assert jnp.allclose(out_r, ref_iou(pred, gt, reduce=True), atol=1e-5, rtol=1e-5)

    # Non-divisible spatial extent -> in-kernel lane masking, single block.
    p2 = jax.random.uniform(jax.random.PRNGKey(3), (2, 3, 17, 19), jnp.float32)
    g2 = (jax.random.uniform(jax.random.PRNGKey(4), (2, 3, 17, 19)) > 0.5).astype(jnp.float32)
    out2 = jax.block_until_ready(iou(p2, g2))
    assert jnp.allclose(out2, ref_iou(p2, g2), atol=1e-5, rtol=1e-5)

    # Larger spatial extent -> exercises the fori_loop chunk path (>32 chunks).
    p3 = jax.random.uniform(jax.random.PRNGKey(5), (1, 2, 72, 72), jnp.float32)
    g3 = jax.random.uniform(jax.random.PRNGKey(6), (1, 2, 72, 72), jnp.float32)
    out3 = jax.block_until_ready(iou(p3, g3))
    assert jnp.allclose(out3, ref_iou(p3, g3), atol=1e-5, rtol=1e-5)

    # Tiny block budget -> multiple row tiles AND multiple hw tiles + masking,
    # exercising the tiled accumulation across both grid axes.
    p4 = jax.random.uniform(jax.random.PRNGKey(7), (4, 8, 40, 20), jnp.float32)
    g4 = (jax.random.uniform(jax.random.PRNGKey(8), (4, 8, 40, 20)) > 0.5).astype(jnp.float32)
    out4 = jax.block_until_ready(iou(p4, g4, target_block_bytes=4096))
    assert jnp.allclose(out4, ref_iou(p4, g4), atol=1e-5, rtol=1e-5)

    print("KERNEL_OK")
</pallas_src>

<mosaic_0001>
module attributes {stable_mosaic.version = 11 : i64} {
  func.func @kernel(%arg0: i32, %arg1: i32, %arg2: memref<8x256xf32, #tpu.memory_space<vmem>>, %arg3: memref<8x256xf32, #tpu.memory_space<vmem>>, %arg4: memref<8x1xf32, #tpu.memory_space<vmem>>, %arg5: memref<8x128xf32, #tpu.memory_space<vmem>>, %arg6: memref<8x128xf32, #tpu.memory_space<vmem>>) attributes {dimension_semantics = [#tpu.dimension_semantics<parallel>, #tpu.dimension_semantics<arbitrary>], iteration_bounds = array<i64: 1, 1>, scalar_prefetch = 0 : i64, scratch_operands = 2 : i64, tpu.core_type = #tpu.core_type<tc>, window_params = [{transform_indices = @transform_0, window_bounds = array<i64: 8, 256>}, {transform_indices = @transform_1, window_bounds = array<i64: 8, 256>}, {transform_indices = @transform_2, window_bounds = array<i64: 8, 1>}]} {
    %c0_i32 = arith.constant 0 : i32
    %0 = arith.cmpi eq, %arg1, %c0_i32 : i32
    %1 = arith.extui %0 : i1 to i32
    %c0_i32_0 = arith.constant 0 : i32
    %2 = arith.cmpi ne, %1, %c0_i32_0 : i32
    scf.if %2 {
      %cst = arith.constant 0.000000e+00 : f32
      %26 = vector.broadcast %cst : f32 to vector<8x128xf32>
      %c0_25 = arith.constant 0 : index
      %c0_26 = arith.constant 0 : index
      %27 = vector.load %arg5[%c0_25, %c0_26] : memref<8x128xf32, #tpu.memory_space<vmem>>, vector<8x128xf32>
      tpu.vector_store %arg5[%c0_25, %c0_26], %26 {strides = array<i32>} : memref<8x128xf32, #tpu.memory_space<vmem>>, vector<8x128xf32>,
      %cst_27 = arith.constant 0.000000e+00 : f32
      %28 = vector.broadcast %cst_27 : f32 to vector<8x128xf32>
      %c0_28 = arith.constant 0 : index
      %c0_29 = arith.constant 0 : index
      %29 = vector.load %arg6[%c0_28, %c0_29] : memref<8x128xf32, #tpu.memory_space<vmem>>, vector<8x128xf32>
      tpu.vector_store %arg6[%c0_28, %c0_29], %28 {strides = array<i32>} : memref<8x128xf32, #tpu.memory_space<vmem>>, vector<8x128xf32>,
    } else {
    }
    %c0 = arith.constant 0 : index
    %c0_1 = arith.constant 0 : index
    %3 = vector.load %arg2[%c0, %c0_1] : memref<8x256xf32, #tpu.memory_space<vmem>>, vector<8x128xf32>
    %c0_2 = arith.constant 0 : index
    %c0_3 = arith.constant 0 : index
    %4 = vector.load %arg3[%c0_2, %c0_3] : memref<8x256xf32, #tpu.memory_space<vmem>>, vector<8x128xf32>
    %c0_4 = arith.constant 0 : index
    %c0_5 = arith.constant 0 : index
    %5 = vector.load %arg5[%c0_4, %c0_5] : memref<8x128xf32, #tpu.memory_space<vmem>>, vector<8x128xf32>
    %6 = arith.mulf %3, %4 : vector<8x128xf32>
    %7 = arith.addf %5, %6 : vector<8x128xf32>
    %c0_6 = arith.constant 0 : index
    %c0_7 = arith.constant 0 : index
    %8 = vector.load %arg5[%c0_6, %c0_7] : memref<8x128xf32, #tpu.memory_space<vmem>>, vector<8x128xf32>
    tpu.vector_store %arg5[%c0_6, %c0_7], %7 {strides = array<i32>} : memref<8x128xf32, #tpu.memory_space<vmem>>, vector<8x128xf32>,
    %c0_8 = arith.constant 0 : index
    %c0_9 = arith.constant 0 : index
    %9 = vector.load %arg6[%c0_8, %c0_9] : memref<8x128xf32, #tpu.memory_space<vmem>>, vector<8x128xf32>
    %10 = arith.addf %3, %4 : vector<8x128xf32>
    %11 = arith.addf %9, %10 : vector<8x128xf32>
    %c0_10 = arith.constant 0 : index
    %c0_11 = arith.constant 0 : index
    %12 = vector.load %arg6[%c0_10, %c0_11] : memref<8x128xf32, #tpu.memory_space<vmem>>, vector<8x128xf32>
    tpu.vector_store %arg6[%c0_10, %c0_11], %11 {strides = array<i32>} : memref<8x128xf32, #tpu.memory_space<vmem>>, vector<8x128xf32>,
    %c0_12 = arith.constant 0 : index
    %c128 = arith.constant 128 : index
    %13 = vector.load %arg2[%c0_12, %c128] : memref<8x256xf32, #tpu.memory_space<vmem>>, vector<8x128xf32>
    %c0_13 = arith.constant 0 : index
    %c128_14 = arith.constant 128 : index
    %14 = vector.load %arg3[%c0_13, %c128_14] : memref<8x256xf32, #tpu.memory_space<vmem>>, vector<8x128xf32>
    %c0_15 = arith.constant 0 : index
    %c0_16 = arith.constant 0 : index
    %15 = vector.load %arg5[%c0_15, %c0_16] : memref<8x128xf32, #tpu.memory_space<vmem>>, vector<8x128xf32>
    %16 = arith.mulf %13, %14 : vector<8x128xf32>
    %17 = arith.addf %15, %16 : vector<8x128xf32>
    %c0_17 = arith.constant 0 : index
    %c0_18 = arith.constant 0 : index
    %18 = vector.load %arg5[%c0_17, %c0_18] : memref<8x128xf32, #tpu.memory_space<vmem>>, vector<8x128xf32>
    tpu.vector_store %arg5[%c0_17, %c0_18], %17 {strides = array<i32>} : memref<8x128xf32, #tpu.memory_space<vmem>>, vector<8x128xf32>,
    %c0_19 = arith.constant 0 : index
    %c0_20 = arith.constant 0 : index
    %19 = vector.load %arg6[%c0_19, %c0_20] : memref<8x128xf32, #tpu.memory_space<vmem>>, vector<8x128xf32>
    %20 = arith.addf %13, %14 : vector<8x128xf32>
    %21 = arith.addf %19, %20 : vector<8x128xf32>
    %c0_21 = arith.constant 0 : index
    %c0_22 = arith.constant 0 : index
    %22 = vector.load %arg6[%c0_21, %c0_22] : memref<8x128xf32, #tpu.memory_space<vmem>>, vector<8x128xf32>
    tpu.vector_store %arg6[%c0_21, %c0_22], %21 {strides = array<i32>} : memref<8x128xf32, #tpu.memory_space<vmem>>, vector<8x128xf32>,
    %c0_i32_23 = arith.constant 0 : i32
    %23 = arith.cmpi eq, %arg1, %c0_i32_23 : i32
    %24 = arith.extui %23 : i1 to i32
    %c0_i32_24 = arith.constant 0 : i32
    %25 = arith.cmpi ne, %24, %c0_i32_24 : i32
    scf.if %25 {
      %c0_25 = arith.constant 0 : index
      %c0_26 = arith.constant 0 : index
      %26 = vector.load %arg5[%c0_25, %c0_26] : memref<8x128xf32, #tpu.memory_space<vmem>>, vector<8x128xf32>
      %cst = arith.constant dense<0.000000e+00> : vector<8xf32>
      %27 = vector.multi_reduction <add>, %26, %cst [1] : vector<8x128xf32> to vector<8xf32>
      %28 = vector.shape_cast %27 : vector<8xf32> to vector<8x1xf32>
      %c0_27 = arith.constant 0 : index
      %c0_28 = arith.constant 0 : index
      %29 = vector.load %arg6[%c0_27, %c0_28] : memref<8x128xf32, #tpu.memory_space<vmem>>, vector<8x128xf32>
      %cst_29 = arith.constant dense<0.000000e+00> : vector<8xf32>
      %30 = vector.multi_reduction <add>, %29, %cst_29 [1] : vector<8x128xf32> to vector<8xf32>
      %31 = vector.shape_cast %30 : vector<8xf32> to vector<8x1xf32>
      %32 = arith.subf %31, %28 : vector<8x1xf32>
      %cst_30 = arith.constant 9.99999997E-7 : f32
      %33 = vector.broadcast %cst_30 : f32 to vector<8x1xf32>
      %34 = arith.addf %32, %33 : vector<8x1xf32>
      %35 = arith.divf %28, %34 : vector<8x1xf32>
      %c0_31 = arith.constant 0 : index
      %c0_32 = arith.constant 0 : index
      %36 = vector.load %arg4[%c0_31, %c0_32] : memref<8x1xf32, #tpu.memory_space<vmem>>, vector<8x1xf32>
      tpu.vector_store %arg4[%c0_31, %c0_32], %35 {strides = array<i32>} : memref<8x1xf32, #tpu.memory_space<vmem>>, vector<8x1xf32>,
    } else {
    }
    return
  }
  func.func @transform_0(%arg0: i32, %arg1: i32) -> (i32, i32) {
    %c0_i32 = arith.constant 0 : i32
    return %arg0, %arg1 : i32, i32
  }
  func.func @transform_1(%arg0: i32, %arg1: i32) -> (i32, i32) {
    %c0_i32 = arith.constant 0 : i32
    return %arg0, %arg1 : i32, i32
  }
  func.func @transform_2(%arg0: i32, %arg1: i32) -> (i32, i32) {
    %c0_i32 = arith.constant 0 : i32
    %c0_i32_0 = arith.constant 0 : i32
    return %arg0, %c0_i32 : i32, i32
  }
}

</mosaic_0001>

<llo_original>
// kernel: tpu_custom_call.1
$region0: #{tpu_custom_call.1}
  #allocation0 [shape = 'u32[]', space=smem, size = 0x4, offset = 0x4, fixed_abs, tag = 'smem constant byte address 0x4 - core index']
  #allocation1 [shape = 'u32[144,128]{1,0:T(1,128)}', space=vmem, size = 0x12000, scoped, tag = 'internal scratch']
  #allocation2 [shape = 'f32[8,128]{1,0:T(8,128)}', space=vmem, size = 0x1000, scoped, tag = 'scratch operand']
  #allocation3 [shape = 'f32[8,128]{1,0:T(8,128)}', space=vmem, size = 0x1000, scoped, tag = 'scratch operand']
  %s0 = inlined_call_operand.hbm [shape: f32[8,256], index: 0, kind: input, shape index: {}]
  %s1 = inlined_call_operand.hbm [shape: f32[8,256], index: 1, kind: input, shape index: {}]
  %s2 = inlined_call_operand.vmem [shape: f32[8,1], index: 2, kind: output, shape index: {}]
  %s3 = sld [smem:[#allocation0]]
  $region34: #{tpu_custom_call.1} parent=0
    _
  %s5 = ssub.s32 1, %s3
  %s6 = scalar_select 0, %s5, %s3
  $region1: #{tpu_custom_call.1} parent=0
    #allocation4 [shape = 'u8[8192]{0}', space=vmem, size = 0x2000, scoped, tag = 'input window, operand 0, single buffered']
    #allocation5 [shape = 's32[1]{0}', space=sflag, size = 0x4, scoped, tag = 'scoped memory for tpu_custom_call.1']
    #allocation6 [shape = 'u8[8192]{0}', space=vmem, size = 0x2000, scoped, tag = 'input window, operand 1, single buffered']
    #allocation7 [shape = 's32[1]{0}', space=sflag, size = 0x4, scoped, tag = 'scoped memory for tpu_custom_call.1']
    %7 = vsyncpa [#allocation5], 0
    %8 = vsyncpa [#allocation7], 0
    // Predicated region
    $region2: #{tpu_custom_call.1} parent=1 // pred_check
      _
    $region3: #{tpu_custom_call.1} parent=1 // pred_check_branch
      %10 = sbr.rel (0) target = $region5
    $region4: #{tpu_custom_call.1} parent=1 // pred_region
      %s12 = ssub.s32 256, 256
      %13 = vsyncadd [#allocation5], %s12
      %s15 = sshll.u32 [#allocation4], 4
      %s16 = int_to_ptr.vmem [resolvable:$true] %s15
      %18 = dma.hbm_to_vmem [thread:$0]  %s0, 256, %s16, [#allocation5]
    $region5: #{tpu_custom_call.1} parent=1 // pred_fallthru
      _
    // Predicated region
    $region6: #{tpu_custom_call.1} parent=1 // pred_check
      _
    $region7: #{tpu_custom_call.1} parent=1 // pred_check_branch
      %20 = sbr.rel (0) target = $region9
    $region8: #{tpu_custom_call.1} parent=1 // pred_region
      %s22 = ssub.s32 256, 256
      %23 = vsyncadd [#allocation7], %s22
      %s25 = sshll.u32 [#allocation6], 4
      %s26 = int_to_ptr.vmem [resolvable:$true] %s25
      %28 = dma.hbm_to_vmem [thread:$0]  %s1, 256, %s26, [#allocation7]
    $region9: #{tpu_custom_call.1} parent=1 // pred_fallthru
      _
    // Predicated region
    $region10: #{tpu_custom_call.1} parent=1 // pred_check
      _
    $region11: #{tpu_custom_call.1} parent=1 // pred_check_branch
      %30 = sbr.rel (0) target = $region13
    $region12: #{tpu_custom_call.1} parent=1 // pred_region
      %31 = dma.done [#allocation5], 256
    $region13: #{tpu_custom_call.1} parent=1 // pred_fallthru
      _
    // Predicated region
    $region14: #{tpu_custom_call.1} parent=1 // pred_check
      _
    $region15: #{tpu_custom_call.1} parent=1 // pred_check_branch
      %33 = sbr.rel (0) target = $region17
    $region16: #{tpu_custom_call.1} parent=1 // pred_region
      %34 = dma.done [#allocation7], 256
    $region17: #{tpu_custom_call.1} parent=1 // pred_fallthru
      _
    %p35 = scmp.eq.s32.totalorder 0, 0
    // Predicated region
    $region18: #{tpu_custom_call.1} parent=1 // pred_check
      %p36 = pneg %p35
    $region19: #{tpu_custom_call.1} parent=1 // pred_check_branch
      %38 = sbr.rel (%p36) target = $region21
    $region20: #{tpu_custom_call.1} parent=1 // pred_region
      %39 = vst [vmem:[#allocation2] sm:$0xff] 0.0
      %40 = vst [vmem:[#allocation3] sm:$0xff] 0.0
    $region21: #{tpu_custom_call.1} parent=1 // pred_fallthru
      _
    %v41 = vld [vmem:[#allocation4] sm:$0xff]
    %v42 = vld [vmem:[#allocation6] sm:$0xff]
    %v43 = vld [vmem:[#allocation2] sm:$0xff]
    %v44 = vmul.f32 %v41, %v42
    %v45 = vadd.f32 %v43, %v44
    %46 = vst [vmem:[#allocation2] sm:$0xff] %v45
    %v47 = vld [vmem:[#allocation3] sm:$0xff]
    %v48 = vadd.f32 %v41, %v42
    %v49 = vadd.f32 %v47, %v48
    %50 = vst [vmem:[#allocation3] sm:$0xff] %v49
    %v51 = vld [vmem:[#allocation4 + $0x8] sm:$0xff]
    %v52 = vld [vmem:[#allocation6 + $0x8] sm:$0xff]
    %v53 = vld [vmem:[#allocation2] sm:$0xff]
    %v54 = vmul.f32 %v51, %v52
    %v55 = vadd.f32 %v53, %v54
    %56 = vst [vmem:[#allocation2] sm:$0xff] %v55
    %v57 = vld [vmem:[#allocation3] sm:$0xff]
    %v58 = vadd.f32 %v51, %v52
    %v59 = vadd.f32 %v57, %v58
    %60 = vst [vmem:[#allocation3] sm:$0xff] %v59
    // Predicated region
    $region22: #{tpu_custom_call.1} parent=1 // pred_check
      %p61 = pneg %p35
    $region23: #{tpu_custom_call.1} parent=1 // pred_check_branch
      %63 = sbr.rel (%p61) target = $region25
    $region24: #{tpu_custom_call.1} parent=1 // pred_region
      %v64 = vld [vmem:[#allocation2] sm:$0xff]
      %65 = vadd.xlane.f32.xlu0 %v64
      %v66 = vpop.xlane.xlu0 %65
      %v67 = vld [vmem:[#allocation3] sm:$0xff]
      %68 = vadd.xlane.f32.xlu0 %v67
      %v69 = vpop.xlane.xlu0 %68
      %v70 = vsub.f32 %v69, %v66
      %v71 = vadd.f32 %v70, 1e-06
      %v72 = vrcp.pop %v71
      %v73 = vmul.f32 %v66, %v72
      %vm74 = vcmask 7168
      %75 = vst.msk [vmem:[%s2] sm:$0xff] %vm74, %v73
    $region25: #{tpu_custom_call.1} parent=1 // pred_fallthru
      _
    // Predicated region
    $region26: #{tpu_custom_call.1} parent=1 // pred_check
      _
    $region27: #{tpu_custom_call.1} parent=1 // pred_check_branch
      %77 = sbr.rel (0) target = $region29
    $region28: #{tpu_custom_call.1} parent=1 // pred_region
      _
    $region29: #{tpu_custom_call.1} parent=1 // pred_fallthru
      _
    // Predicated region
    $region30: #{tpu_custom_call.1} parent=1 // pred_check
      _
    $region31: #{tpu_custom_call.1} parent=1 // pred_check_branch
      %79 = sbr.rel (0) target = $region33
    $region32: #{tpu_custom_call.1} parent=1 // pred_region
      _
    $region33: #{tpu_custom_call.1} parent=1 // pred_fallthru
      _
    %80 = vsyncpa [#allocation5], 1
    %81 = vsyncpa [#allocation7], 1

</llo_original>
